<compile_context>
chip_gen: v7x
topology: tpu7x:2x2x1
jax: 0.10.0
libtpu: 0.0.40
codegen_flags: <defaults>
</compile_context>

<pallas_src>
import functools

import jax
import jax.numpy as jnp
from jax.experimental import pallas as pl
from jax.experimental.pallas import tpu as pltpu


def _round_up(x, m):
    return (x + m - 1) // m * m


# ---------------------------------------------------------------------------
# Kernel: one (batch, time-tile) step.
#   xprev_ref, xcur_ref : (Lt, Cinp) bf16   previous / current time tile of x
#   w1_ref              : (K*Cinp, Coutp) bf16   im2col-packed conv1 weight
#   b1_ref              : (1, Coutp) f32
#   w2_ref              : (K*Coutp, Coutp) bf16  im2col-packed conv2 weight
#   b2_ref              : (1, Coutp) f32
#   [rw_ref (Cinp,Coutp) bf16, rb_ref (1,Coutp) f32]  only if Cin != Cout
#   o_ref               : (Lt, Coutp) f32
# ---------------------------------------------------------------------------
def _residual_block_kernel(xprev_ref, xcur_ref, w1_ref, b1_ref, w2_ref,
                           b2_ref, *rest, K, d, p, Lt, has_res):
    if has_res:
        rw_ref, rb_ref, o_ref = rest
    else:
        (o_ref,) = rest

    Lh = Lt + p                              # rows of h needed by this tile
    xcur = xcur_ref[...]                     # (Lt, Cinp) bf16

    # ---- x window covering global times [t0 - 2p, t0 + Lt) -----------------
    if p > 0:
        xwin = jnp.concatenate([xprev_ref[Lt - 2 * p:, :], xcur], axis=0)
    else:
        xwin = xcur

    # ---- conv1: im2col over K taps -> one bf16 MXU matmul (f32 accumulate) --
    xcol = jnp.concatenate([xwin[k * d:k * d + Lh, :] for k in range(K)],
                           axis=1)           # (Lh, K*Cinp)
    acc1 = jnp.dot(xcol, w1_ref[...], preferred_element_type=jnp.float32)
    h = jnp.maximum(acc1 + b1_ref[...], 0.0)  # chomp + ReLU; dropout1 = id

    # zero h rows that lie before the start of the sequence (tile 0's halo)
    if p > 0:
        t0 = pl.program_id(1) * Lt
        row_t = t0 - p + jax.lax.broadcasted_iota(jnp.int32, (Lh, 1), 0)
        h = jnp.where(row_t >= 0, h, 0.0)

    # ---- conv2: same im2col trick on h --------------------------------------
    hb = h.astype(jnp.bfloat16)
    hcol = jnp.concatenate([hb[k * d:k * d + Lt, :] for k in range(K)],
                           axis=1)           # (Lt, K*Coutp)
    acc2 = jnp.dot(hcol, w2_ref[...], preferred_element_type=jnp.float32)
    out2 = jnp.maximum(acc2 + b2_ref[...], 0.0)   # chomp + ReLU; dropout2 = id

    # ---- residual ------------------------------------------------------------
    if has_res:
        res = jnp.dot(xcur, rw_ref[...], preferred_element_type=jnp.float32)
        res = res + rb_ref[...]
    else:
        res = xcur.astype(jnp.float32)

    o_ref[...] = jnp.maximum(out2 + res, 0.0).astype(o_ref.dtype)


# ---------------------------------------------------------------------------
# (B, L, C) native wrapper — keep a TCN stack in this layout between blocks.
# ---------------------------------------------------------------------------
def residual_block_chomp_blc(x_blc, params, *, kernel_size, dilation, padding,
                             time_tile=512):
    K, d, p = kernel_size, dilation, padding
    assert p == (K - 1) * d, "TCN causal setting requires padding == (K-1)*dilation"
    B, L, Cin = x_blc.shape
    Cout = params["w1_oik"].shape[0]
    has_res = Cin != Cout

    Cinp = _round_up(Cin, 128)               # lane-dense channels
    Coutp = _round_up(Cout, 128)
    # time tile: multiple of 8, >= 2p (halo), capped by the (rounded) seq len
    Lt = max(_round_up(min(time_tile, _round_up(L, 8)), 8),
             _round_up(max(2 * p, 8), 8))
    n_t = -(-L // Lt)

    # activations -> bf16; pad channels to 128-multiple; time pad: Lt zeros on
    # the left (halo source for tile 0) + right-pad up to n_t * Lt.
    x = jnp.pad(x_blc.astype(jnp.bfloat16),
                ((0, 0), (Lt, n_t * Lt - L), (0, Cinp - Cin)))

    def pack_conv_w(w_oik, cin, cinp):
        kk = w_oik.shape[2]
        w = jnp.transpose(w_oik, (2, 1, 0))                   # (K, Cin, Cout)
        w = jnp.pad(w, ((0, 0), (0, cinp - cin), (0, Coutp - Cout)))
        return w.reshape(kk * cinp, Coutp).astype(jnp.bfloat16)

    def pack_bias(b):
        return jnp.pad(b, (0, Coutp - Cout)).reshape(1, Coutp).astype(jnp.float32)

    w1c = pack_conv_w(params["w1_oik"], Cin, Cinp)
    w2c = pack_conv_w(params["w2_oik"], Cout, Coutp)
    b1 = pack_bias(params["b1"])
    b2 = pack_bias(params["b2"])

    act_prev = pl.BlockSpec((None, Lt, Cinp), lambda b, j: (b, j, 0))
    act_cur = pl.BlockSpec((None, Lt, Cinp), lambda b, j: (b, j + 1, 0))

    def resident(arr):                       # full array, stays in VMEM
        zeros = (0,) * arr.ndim
        return pl.BlockSpec(arr.shape, lambda b, j: zeros)

    inputs = [x, x, w1c, b1, w2c, b2]
    in_specs = [act_prev, act_cur, resident(w1c), resident(b1),
                resident(w2c), resident(b2)]
    if has_res:
        rw = jnp.pad(params["rw_oik"][:, :, 0].T,
                     ((0, Cinp - Cin), (0, Coutp - Cout))).astype(jnp.bfloat16)
        rb = pack_bias(params["rb"])
        inputs += [rw, rb]
        in_specs += [resident(rw), resident(rb)]

    kernel = functools.partial(_residual_block_kernel, K=K, d=d, p=p, Lt=Lt,
                               has_res=has_res)

    # Rough VMEM budget (double-buffered tiles + resident weights + values),
    # clamped to <= 48 MiB so the same tiling keeps 2-deep pipelining headroom
    # on v7x's 64 MiB VMEM (v5e/v6e have 128 MiB).
    Lh = Lt + p
    est = (2 * 2 * (Lt * Cinp * 2)                 # prev + cur input blocks
           + 2 * (Lt * Coutp * 4)                  # output block
           + 2 * (w1c.size + w2c.size) * 2 + 2 * 2 * Coutp * 4
           + (Lt + 2 * p) * Cinp * 2               # xwin
           + Lh * K * Cinp * 2 + Lt * K * Coutp * 2   # im2col slabs
           + 3 * Lh * Coutp * 4)                   # acc1 / h / acc2
    if has_res:
        est += 2 * Cinp * Coutp * 2 + Coutp * 4
    vmem_limit = int(min(48 * 2 ** 20, max(2 * est, 32 * 2 ** 20)))

    flops = (2 * B * n_t * Lt * K * Cinp * Coutp
             + 2 * B * n_t * Lt * K * Coutp * Coutp
             + (2 * B * n_t * Lt * Cinp * Coutp if has_res else 0))
    bytes_accessed = (2 * x.size * 2                       # prev + cur reads
                      + (w1c.size + w2c.size) * 2
                      + B * n_t * Lt * Coutp * 4)          # output writes

    out = pl.pallas_call(
        kernel,
        grid=(B, n_t),
        out_shape=jax.ShapeDtypeStruct((B, n_t * Lt, Coutp), jnp.float32),
        in_specs=in_specs,
        out_specs=pl.BlockSpec((None, Lt, Coutp), lambda b, j: (b, j, 0)),
        compiler_params=pltpu.CompilerParams(
            dimension_semantics=("parallel", "parallel"),
            vmem_limit_bytes=vmem_limit),
        cost_estimate=pl.CostEstimate(flops=int(flops), transcendentals=0,
                                      bytes_accessed=int(bytes_accessed)),
    )(*inputs)

    return out[:, :L, :Cout]


def residual_block_chomp(x_ncl, params, *, kernel_size, dilation, padding,
                         time_tile=512):
    """PyTorch-NCL adapter.  In a stacked TCN keep activations in (B, L, C)
    and call residual_block_chomp_blc directly so the layout transpose happens
    once per network instead of once per block."""
    x = jnp.transpose(x_ncl, (0, 2, 1))
    y = residual_block_chomp_blc(x, params, kernel_size=kernel_size,
                                 dilation=dilation, padding=padding,
                                 time_tile=time_tile)
    return jnp.transpose(y, (0, 2, 1))


# ---------------------------------------------------------------------------
# Deterministic synthetic parameters (PyTorch layouts: weight (Cout,Cin,K),
# bias (Cout,)).  weight_norm at PyTorch init has g = ||v||, so the effective
# weight equals v; we pass the folded effective weights.
# ---------------------------------------------------------------------------
def _xavier_uniform(key, shape):
    cout, cin, k = shape
    bound = (6.0 / (cin * k + cout * k)) ** 0.5
    return jax.random.uniform(key, shape, jnp.float32, -bound, bound)


def make_params(key, in_channels, out_channels, kernel_size):
    k1, k2, k3, k4, k5, k6 = jax.random.split(key, 6)
    params = {
        "w1_oik": _xavier_uniform(k1, (out_channels, in_channels, kernel_size)),
        "w2_oik": _xavier_uniform(k2, (out_channels, out_channels, kernel_size)),
        "b1": jax.random.uniform(k3, (out_channels,), jnp.float32, -0.1, 0.1),
        "b2": jax.random.uniform(k4, (out_channels,), jnp.float32, -0.1, 0.1),
    }
    if in_channels != out_channels:
        params["rw_oik"] = _xavier_uniform(k5, (out_channels, in_channels, 1))
        params["rb"] = jax.random.uniform(k6, (out_channels,), jnp.float32,
                                          -0.1, 0.1)
    return params


# ---------------------------------------------------------------------------
# Pure-JAX reference mirroring the PyTorch forward (eval mode).  Conv operands
# are rounded to bf16 exactly like the kernel's MXU path (accumulation in f32)
# so the comparison is tight.
# ---------------------------------------------------------------------------
def ref_forward(x_ncl, params, *, kernel_size, dilation, padding):
    q = lambda a: a.astype(jnp.bfloat16).astype(jnp.float32)

    def conv(inp, w, b, pad, dil):
        y = jax.lax.conv_general_dilated(
            inp, q(w), window_strides=(1,), padding=[(pad, pad)],
            rhs_dilation=(dil,), dimension_numbers=("NCH", "OIH", "NCH"))
        return y + b[None, :, None]

    x = q(x_ncl)
    h = conv(x, params["w1_oik"], params["b1"], padding, dilation)
    if padding > 0:
        h = h[:, :, :-padding]                       # Chomp1d
    h = q(jnp.maximum(h, 0.0))                        # ReLU (+ dropout = id)
    h2 = conv(h, params["w2_oik"], params["b2"], padding, dilation)
    if padding > 0:
        h2 = h2[:, :, :-padding]
    h2 = jnp.maximum(h2, 0.0)
    res = conv(x, params["rw_oik"], params["rb"], 0, 1) if "rw_oik" in params else x
    return jnp.maximum(h2 + res, 0.0)


if __name__ == "__main__":
    K, dilation = 3, 2
    padding = (K - 1) * dilation                      # standard causal TCN

    key = jax.random.PRNGKey(0)
    kx1, kp1, kx2, kp2 = jax.random.split(key, 4)

    # case 1: Cin != Cout  ->  1x1 residual conv path
    B, Cin, Cout, L = 2, 4, 8, 16
    x1 = jax.random.normal(kx1, (B, Cin, L), jnp.float32)
    p1 = make_params(kp1, Cin, Cout, K)
    out1 = jax.block_until_ready(
        residual_block_chomp(x1, p1, kernel_size=K, dilation=dilation,
                             padding=padding))
    ref1 = ref_forward(x1, p1, kernel_size=K, dilation=dilation,
                       padding=padding)
    assert out1.shape == (B, Cout, L), out1.shape
    assert jnp.allclose(out1, ref1, atol=2e-3, rtol=2e-3), \
        float(jnp.max(jnp.abs(out1 - ref1)))

    # case 2: Cin == Cout  ->  identity residual (no res-conv operands shipped)
    x2 = jax.random.normal(kx2, (B, Cout, L), jnp.float32)
    p2 = make_params(kp2, Cout, Cout, K)
    out2 = jax.block_until_ready(
        residual_block_chomp(x2, p2, kernel_size=K, dilation=dilation,
                             padding=padding))
    ref2 = ref_forward(x2, p2, kernel_size=K, dilation=dilation,
                       padding=padding)
    assert out2.shape == (B, Cout, L), out2.shape
    assert jnp.allclose(out2, ref2, atol=2e-3, rtol=2e-3), \
        float(jnp.max(jnp.abs(out2 - ref2)))

    print("KERNEL_OK")
</pallas_src>

<mosaic_0001>
module attributes {stable_mosaic.version = 11 : i64} {
  func.func @_residual_block_kernel(%arg0: i32, %arg1: i32, %arg2: memref<1x16x128xbf16, #tpu.memory_space<vmem>>, %arg3: memref<1x16x128xbf16, #tpu.memory_space<vmem>>, %arg4: memref<384x128xbf16, #tpu.memory_space<vmem>>, %arg5: memref<1x128xf32, #tpu.memory_space<vmem>>, %arg6: memref<384x128xbf16, #tpu.memory_space<vmem>>, %arg7: memref<1x128xf32, #tpu.memory_space<vmem>>, %arg8: memref<128x128xbf16, #tpu.memory_space<vmem>>, %arg9: memref<1x128xf32, #tpu.memory_space<vmem>>, %arg10: memref<1x16x128xf32, #tpu.memory_space<vmem>>) attributes {dimension_semantics = [#tpu.dimension_semantics<parallel>, #tpu.dimension_semantics<parallel>], iteration_bounds = array<i64: 2, 1>, scalar_prefetch = 0 : i64, scratch_operands = 0 : i64, tpu.core_type = #tpu.core_type<tc>, window_params = [{transform_indices = @transform_0, window_bounds = array<i64: 1, 16, 128>}, {transform_indices = @transform_1, window_bounds = array<i64: 1, 16, 128>}, {pipeline_mode = #tpu.pipeline_mode<synchronous>, transform_indices = @transform_2, window_bounds = array<i64: 384, 128>}, {pipeline_mode = #tpu.pipeline_mode<synchronous>, transform_indices = @transform_3, window_bounds = array<i64: 1, 128>}, {pipeline_mode = #tpu.pipeline_mode<synchronous>, transform_indices = @transform_4, window_bounds = array<i64: 384, 128>}, {pipeline_mode = #tpu.pipeline_mode<synchronous>, transform_indices = @transform_5, window_bounds = array<i64: 1, 128>}, {pipeline_mode = #tpu.pipeline_mode<synchronous>, transform_indices = @transform_6, window_bounds = array<i64: 128, 128>}, {pipeline_mode = #tpu.pipeline_mode<synchronous>, transform_indices = @transform_7, window_bounds = array<i64: 1, 128>}, {transform_indices = @transform_8, window_bounds = array<i64: 1, 16, 128>}]} {
    %c0 = arith.constant 0 : index
    %c0_0 = arith.constant 0 : index
    %c0_1 = arith.constant 0 : index
    %0 = vector.load %arg3[%c0, %c0_0, %c0_1] : memref<1x16x128xbf16, #tpu.memory_space<vmem>>, vector<1x16x128xbf16>
    %1 = vector.shape_cast %0 : vector<1x16x128xbf16> to vector<16x128xbf16>
    %c0_2 = arith.constant 0 : index
    %c8 = arith.constant 8 : index
    %c0_3 = arith.constant 0 : index
    %2 = vector.load %arg2[%c0_2, %c8, %c0_3] : memref<1x16x128xbf16, #tpu.memory_space<vmem>>, vector<1x8x128xbf16>
    %3 = vector.shape_cast %2 : vector<1x8x128xbf16> to vector<8x128xbf16>
    %4 = tpu.concatenate %3, %1 in 0 : vector<8x128xbf16>, vector<16x128xbf16> -> vector<24x128xbf16>
    %5 = vector.extract_strided_slice %4 {offsets = [0, 0], sizes = [20, 128], strides = [1, 1]} : vector<24x128xbf16> to vector<20x128xbf16>
    %6 = vector.extract_strided_slice %4 {offsets = [2, 0], sizes = [20, 128], strides = [1, 1]} : vector<24x128xbf16> to vector<20x128xbf16>
    %7 = vector.extract_strided_slice %4 {offsets = [4, 0], sizes = [20, 128], strides = [1, 1]} : vector<24x128xbf16> to vector<20x128xbf16>
    %8 = tpu.concatenate %5, %6, %7 in 1 : vector<20x128xbf16>, vector<20x128xbf16>, vector<20x128xbf16> -> vector<20x384xbf16>
    %c0_4 = arith.constant 0 : index
    %c0_5 = arith.constant 0 : index
    %9 = vector.load %arg4[%c0_4, %c0_5] : memref<384x128xbf16, #tpu.memory_space<vmem>>, vector<384x128xbf16>
    %cst = arith.constant dense<0.000000e+00> : vector<20x128xf32>
    %10 = tpu.matmul %8, %9, %cst {dimension_numbers = #tpu.dot_dimension_numbers<[1], [0], [0], [1], [0, 0, 1, 1], [], []>} : vector<20x384xbf16>, vector<384x128xbf16>, vector<20x128xf32> -> vector<20x128xf32>
    %c0_6 = arith.constant 0 : index
    %c0_7 = arith.constant 0 : index
    %11 = vector.load %arg5[%c0_6, %c0_7] : memref<1x128xf32, #tpu.memory_space<vmem>>, vector<1x128xf32>
    %12 = vector.broadcast %11 : vector<1x128xf32> to vector<20x128xf32>
    %13 = arith.addf %10, %12 : vector<20x128xf32>
    %cst_8 = arith.constant 0.000000e+00 : f32
    %14 = vector.broadcast %cst_8 : f32 to vector<20x128xf32>
    %15 = arith.maximumf %13, %14 : vector<20x128xf32>
    %c16_i32 = arith.constant 16 : i32
    %16 = arith.muli %arg1, %c16_i32 : i32
    %c4_i32 = arith.constant 4 : i32
    %17 = arith.subi %16, %c4_i32 : i32
    %18 = tpu.iota {dimensions = array<i32: 0>} : vector<20x1xi32>
    %19 = vector.broadcast %17 : i32 to vector<20x1xi32>
    %20 = arith.addi %19, %18 : vector<20x1xi32>
    %c0_i32 = arith.constant 0 : i32
    %21 = vector.broadcast %c0_i32 : i32 to vector<20x1xi32>
    %22 = arith.cmpi sge, %20, %21 : vector<20x1xi32>
    %cst_9 = arith.constant 0.000000e+00 : f32
    %23 = vector.shape_cast %22 : vector<20x1xi1> to vector<20x1xi1>
    %24 = vector.broadcast %23 : vector<20x1xi1> to vector<20x128xi1>
    %25 = vector.broadcast %cst_9 : f32 to vector<20x128xf32>
    %26 = arith.select %24, %15, %25 : vector<20x128xi1>, vector<20x128xf32>
    %27 = arith.truncf %26 : vector<20x128xf32> to vector<20x128xbf16>
    %28 = vector.extract_strided_slice %27 {offsets = [0, 0], sizes = [16, 128], strides = [1, 1]} : vector<20x128xbf16> to vector<16x128xbf16>
    %29 = vector.extract_strided_slice %27 {offsets = [2, 0], sizes = [16, 128], strides = [1, 1]} : vector<20x128xbf16> to vector<16x128xbf16>
    %30 = vector.extract_strided_slice %27 {offsets = [4, 0], sizes = [16, 128], strides = [1, 1]} : vector<20x128xbf16> to vector<16x128xbf16>
    %31 = tpu.concatenate %28, %29, %30 in 1 : vector<16x128xbf16>, vector<16x128xbf16>, vector<16x128xbf16> -> vector<16x384xbf16>
    %c0_10 = arith.constant 0 : index
    %c0_11 = arith.constant 0 : index
    %32 = vector.load %arg6[%c0_10, %c0_11] : memref<384x128xbf16, #tpu.memory_space<vmem>>, vector<384x128xbf16>
    %cst_12 = arith.constant dense<0.000000e+00> : vector<16x128xf32>
    %33 = tpu.matmul %31, %32, %cst_12 {dimension_numbers = #tpu.dot_dimension_numbers<[1], [0], [0], [1], [0, 0, 1, 1], [], []>} : vector<16x384xbf16>, vector<384x128xbf16>, vector<16x128xf32> -> vector<16x128xf32>
    %c0_13 = arith.constant 0 : index
    %c0_14 = arith.constant 0 : index
    %34 = vector.load %arg7[%c0_13, %c0_14] : memref<1x128xf32, #tpu.memory_space<vmem>>, vector<1x128xf32>
    %35 = vector.broadcast %34 : vector<1x128xf32> to vector<16x128xf32>
    %36 = arith.addf %33, %35 : vector<16x128xf32>
    %cst_15 = arith.constant 0.000000e+00 : f32
    %37 = vector.broadcast %cst_15 : f32 to vector<16x128xf32>
    %38 = arith.maximumf %36, %37 : vector<16x128xf32>
    %c0_16 = arith.constant 0 : index
    %c0_17 = arith.constant 0 : index
    %39 = vector.load %arg8[%c0_16, %c0_17] : memref<128x128xbf16, #tpu.memory_space<vmem>>, vector<128x128xbf16>
    %cst_18 = arith.constant dense<0.000000e+00> : vector<16x128xf32>
    %40 = tpu.matmul %1, %39, %cst_18 {dimension_numbers = #tpu.dot_dimension_numbers<[1], [0], [0], [1], [0, 0, 1, 1], [], []>} : vector<16x128xbf16>, vector<128x128xbf16>, vector<16x128xf32> -> vector<16x128xf32>
    %c0_19 = arith.constant 0 : index
    %c0_20 = arith.constant 0 : index
    %41 = vector.load %arg9[%c0_19, %c0_20] : memref<1x128xf32, #tpu.memory_space<vmem>>, vector<1x128xf32>
    %42 = vector.broadcast %41 : vector<1x128xf32> to vector<16x128xf32>
    %43 = arith.addf %40, %42 : vector<16x128xf32>
    %44 = arith.addf %38, %43 : vector<16x128xf32>
    %cst_21 = arith.constant 0.000000e+00 : f32
    %45 = vector.broadcast %cst_21 : f32 to vector<16x128xf32>
    %46 = arith.maximumf %44, %45 : vector<16x128xf32>
    %c0_22 = arith.constant 0 : index
    %c0_23 = arith.constant 0 : index
    %c0_24 = arith.constant 0 : index
    %47 = vector.load %arg10[%c0_22, %c0_23, %c0_24] : memref<1x16x128xf32, #tpu.memory_space<vmem>>, vector<1x16x128xf32>
    %48 = vector.shape_cast %47 : vector<1x16x128xf32> to vector<16x128xf32>
    %49 = vector.shape_cast %46 : vector<16x128xf32> to vector<1x16x128xf32>
    tpu.vector_store %arg10[%c0_22, %c0_23, %c0_24], %49 {strides = array<i32>} : memref<1x16x128xf32, #tpu.memory_space<vmem>>, vector<1x16x128xf32>,
    return
  }
  func.func @transform_0(%arg0: i32, %arg1: i32) -> (i32, i32, i32) {
    %c0_i32 = arith.constant 0 : i32
    %c0_i32_0 = arith.constant 0 : i32
    return %arg0, %arg1, %c0_i32 : i32, i32, i32
  }
  func.func @transform_1(%arg0: i32, %arg1: i32) -> (i32, i32, i32) {
    %c1_i32 = arith.constant 1 : i32
    %0 = arith.addi %arg1, %c1_i32 : i32
    %c0_i32 = arith.constant 0 : i32
    %c0_i32_0 = arith.constant 0 : i32
    return %arg0, %0, %c0_i32 : i32, i32, i32
  }
  func.func @transform_2(%arg0: i32, %arg1: i32) -> (i32, i32) {
    %c0_i32 = arith.constant 0 : i32
    %c0_i32_0 = arith.constant 0 : i32
    %c0_i32_1 = arith.constant 0 : i32
    return %c0_i32, %c0_i32_0 : i32, i32
  }
  func.func @transform_3(%arg0: i32, %arg1: i32) -> (i32, i32) {
    %c0_i32 = arith.constant 0 : i32
    %c0_i32_0 = arith.constant 0 : i32
    %c0_i32_1 = arith.constant 0 : i32
    return %c0_i32, %c0_i32_0 : i32, i32
  }
  func.func @transform_4(%arg0: i32, %arg1: i32) -> (i32, i32) {
    %c0_i32 = arith.constant 0 : i32
    %c0_i32_0 = arith.constant 0 : i32
    %c0_i32_1 = arith.constant 0 : i32
    return %c0_i32, %c0_i32_0 : i32, i32
  }
  func.func @transform_5(%arg0: i32, %arg1: i32) -> (i32, i32) {
    %c0_i32 = arith.constant 0 : i32
    %c0_i32_0 = arith.constant 0 : i32
    %c0_i32_1 = arith.constant 0 : i32
    return %c0_i32, %c0_i32_0 : i32, i32
  }
  func.func @transform_6(%arg0: i32, %arg1: i32) -> (i32, i32) {
    %c0_i32 = arith.constant 0 : i32
    %c0_i32_0 = arith.constant 0 : i32
    %c0_i32_1 = arith.constant 0 : i32
    return %c0_i32, %c0_i32_0 : i32, i32
  }
  func.func @transform_7(%arg0: i32, %arg1: i32) -> (i32, i32) {
    %c0_i32 = arith.constant 0 : i32
    %c0_i32_0 = arith.constant 0 : i32
    %c0_i32_1 = arith.constant 0 : i32
    return %c0_i32, %c0_i32_0 : i32, i32
  }
  func.func @transform_8(%arg0: i32, %arg1: i32) -> (i32, i32, i32) {
    %c0_i32 = arith.constant 0 : i32
    %c0_i32_0 = arith.constant 0 : i32
    return %arg0, %arg1, %c0_i32 : i32, i32, i32
  }
}

</mosaic_0001>

<llo_original>
// kernel: tpu_custom_call.1
$region0: #{tpu_custom_call.1}
  #allocation0 [shape = 'u32[]', space=smem, size = 0x4, offset = 0x4, fixed_abs, tag = 'smem constant byte address 0x4 - core index']
  #allocation1 [shape = 'u32[144,128]{1,0:T(1,128)}', space=vmem, size = 0x12000, scoped, tag = 'internal scratch']
  %s0 = inlined_call_operand.hbm [shape: bf16[2,32,128], index: 0, kind: input, shape index: {}]
  %s1 = inlined_call_operand.hbm [shape: bf16[2,32,128], index: 1, kind: input, shape index: {}]
  %s2 = inlined_call_operand.hbm [shape: bf16[384,128], index: 2, kind: input, shape index: {}]
  %s3 = inlined_call_operand.vmem [shape: f32[1,128], index: 3, kind: input, shape index: {}]
  %s4 = inlined_call_operand.hbm [shape: bf16[384,128], index: 4, kind: input, shape index: {}]
  %s5 = inlined_call_operand.vmem [shape: f32[1,128], index: 5, kind: input, shape index: {}]
  %s6 = inlined_call_operand.hbm [shape: bf16[128,128], index: 6, kind: input, shape index: {}]
  %s7 = inlined_call_operand.vmem [shape: f32[1,128], index: 7, kind: input, shape index: {}]
  %s8 = inlined_call_operand.hbm [shape: f32[2,16,128], index: 8, kind: output, shape index: {}]
  %s9 = sld [smem:[#allocation0]]
  $region85: #{tpu_custom_call.1} parent=0
    _
  %s11 = ssub.s32 1, %s9
  %s12 = scalar_select 0, %s11, %s9
  $region1: #{tpu_custom_call.1} parent=0
    #allocation2 [shape = 'u8[8192]{0}', space=vmem, size = 0x2000, scoped, tag = 'input window, operand 0']
    #allocation3 [shape = 's32[2]{0}', space=sflag, size = 0x8, scoped, tag = 'scoped memory for tpu_custom_call.1']
    #allocation4 [shape = 's32[2]{0}', space=sflag, size = 0x8, scoped, tag = 'scoped memory for tpu_custom_call.1']
    #allocation5 [shape = 'u8[8192]{0}', space=vmem, size = 0x2000, scoped, tag = 'input window, operand 1']
    #allocation6 [shape = 's32[2]{0}', space=sflag, size = 0x8, scoped, tag = 'scoped memory for tpu_custom_call.1']
    #allocation7 [shape = 'u8[98304]{0}', space=vmem, size = 0x18000, scoped, tag = 'input window, operand 2, single buffered']
    #allocation8 [shape = 'u8[98304]{0}', space=vmem, size = 0x18000, scoped, tag = 'input window, operand 4, single buffered']
    #allocation9 [shape = 's32[1]{0}', space=sflag, size = 0x4, scoped, tag = 'scoped memory for tpu_custom_call.1']
    #allocation10 [shape = 'u8[32768]{0}', space=vmem, size = 0x8000, scoped, tag = 'input window, operand 6, single buffered']
    #allocation11 [shape = 'u8[16384]{0}', space=vmem, size = 0x4000, scoped, tag = 'output window, operand 0']
    %13 = vsyncpa [#allocation3], 0
    %s14 = scalar_lea.sflag [#allocation3], 1
    %15 = vsyncpa %s14, 0
    %16 = vsyncpa [#allocation6], 0
    %s17 = scalar_lea.sflag [#allocation6], 1
    %18 = vsyncpa %s17, 0
    %19 = vsyncpa [#allocation9], 0
    %20 = vsyncpa [#allocation4], 0
    %s21 = scalar_lea.sflag [#allocation4], 1
    %22 = vsyncpa %s21, 0
    loop: start=0, step=1, limit=4
    $region2: #{tpu_custom_call.1} parent=1 // loop_pre_header
      _
    $region3: #{tpu_custom_call.1} parent=1 // loop_header
      %s24 = sphi 0, %s28
      %p25 = scmp.ge.s32.totalorder %s24, 4
      %s31 = sphi 0, %s43
      %s32 = sphi 0, %s39
      %s33 = sphi 0, %s31
      %s34 = sphi 0, %s32
      %s35 = sphi 0, %s33
      %s36 = sphi 0, %s34
      %s48 = sphi 0, %s50
      %s51 = sphi 0, %s48
      %s52 = sphi 0, %s51
      %s68 = sphi 0, %s52
      %s78 = sphi 0, %s80
      %s81 = sphi 0, %s78
      %s82 = sphi 0, %s81
      %s98 = sphi 0, %s82
      %s102 = sphi 0, %s102
      %s104 = sphi 0, %s102
      %s105 = sphi 0, %s104
      %s119 = sphi 0, %s105
      %s123 = sphi 0, %s123
      %s125 = sphi 0, %s123
      %s126 = sphi 0, %s125
      %s140 = sphi 0, %s126
      %s144 = sphi 0, %s144
      %s146 = sphi 0, %s144
      %s147 = sphi 0, %s146
      %s161 = sphi 0, %s147
      %s165 = sphi 0, %s165
      %s167 = sphi 0, %s165
      %s168 = sphi 0, %s167
      %s182 = sphi 0, %s168
      %s186 = sphi 0, %s186
      %s188 = sphi 0, %s186
      %s189 = sphi 0, %s188
      %s203 = sphi 0, %s189
      %s207 = sphi 0, %s207
      %s209 = sphi 0, %s207
      %s210 = sphi 0, %s209
      %s224 = sphi 0, %s210
      %s232 = sphi 0, %s234
      %s235 = sphi 0, %s232
      %s236 = sphi 0, %s235
      %s252 = sphi 0, %s236
    $region4: #{tpu_custom_call.1} parent=1 // loop_header_branch
      %27 = sbr.rel (%p25) target = $region8
    $region5: #{tpu_custom_call.1} parent=1 // loop_body
      %s29 = ssub.s32 %s24, 1
      %s30 = ssub.s32 %s24, 2
      %s37 = sadd.s32 1, %s32
      %p38 = scmp.ge.s32.totalorder %s37, 1
      %s39 = scalar_select %p38, 0, %s37
      %s40 = sadd.s32 1, %s31
      %s41 = scalar_select %p38, %s40, %s31
      %p42 = scmp.ge.s32.totalorder %s41, 2
      %s43 = scalar_select %p42, 0, %s41
      %s44 = ssub.s32 %s31, %s43
      %s45 = ssub.s32 %s32, %s39
      %s46 = sor.u32 %s44, %s45
      %p47 = scmp.eq.s32.totalorder %s46, 0
      %s49 = sadd.s32 %s48, 1
      %s50 = scalar_select %p47, %s48, %s49
      %p53 = pneg %p47
      %p54 = scmp.eq.s32.totalorder %s24, 1
      %p55 = por %p53, %p54
      %p56 = scmp.ne.s32.totalorder %s48, %s51
      %p57 = scmp.eq.s32.totalorder %s24, 0
      %p58 = por %p56, %p57
      %p59 = scmp.ne.s32.totalorder %s48, %s51
      %p60 = scmp.eq.s32.totalorder %s29, 1
      %p61 = por %p59, %p60
      %p62 = scmp.ne.s32.totalorder %s51, %s52
      %p63 = scmp.eq.s32.totalorder %s29, 0
      %p64 = por %p62, %p63
      %p65 = scmp.ne.s32.totalorder %s51, %s52
      %p66 = scmp.eq.s32.totalorder %s30, 1
      %p67 = por %p65, %p66
      %p69 = scmp.ne.s32.totalorder %s52, %s68
      %p70 = scmp.eq.s32.totalorder %s30, 0
      %p71 = por %p69, %p70
      %s72 = sadd.s32 %s32, 1
      %s73 = sadd.s32 %s39, 1
      %s74 = ssub.s32 %s31, %s43
      %s75 = ssub.s32 %s72, %s73
      %s76 = sor.u32 %s74, %s75
      %p77 = scmp.eq.s32.totalorder %s76, 0
      %s79 = sadd.s32 %s78, 1
      %s80 = scalar_select %p77, %s78, %s79
      %p83 = pneg %p77
      %p84 = scmp.eq.s32.totalorder %s24, 1
      %p85 = por %p83, %p84
      %p86 = scmp.ne.s32.totalorder %s78, %s81
      %p87 = scmp.eq.s32.totalorder %s24, 0
      %p88 = por %p86, %p87
      %p89 = scmp.ne.s32.totalorder %s78, %s81
      %p90 = scmp.eq.s32.totalorder %s29, 1
      %p91 = por %p89, %p90
      %p92 = scmp.ne.s32.totalorder %s81, %s82
      %p93 = scmp.eq.s32.totalorder %s29, 0
      %p94 = por %p92, %p93
      %p95 = scmp.ne.s32.totalorder %s81, %s82
      %p96 = scmp.eq.s32.totalorder %s30, 1
      %p97 = por %p95, %p96
      %p99 = scmp.ne.s32.totalorder %s82, %s98
      %p100 = scmp.eq.s32.totalorder %s30, 0
      %p101 = por %p99, %p100
      %s103 = sadd.s32 %s102, 1
      %p106 = scmp.eq.s32.totalorder %s24, 1
      %p107 = scmp.ne.s32.totalorder %s102, %s104
      %p108 = scmp.eq.s32.totalorder %s24, 0
      %p109 = por %p107, %p108
      %p110 = scmp.ne.s32.totalorder %s102, %s104
      %p111 = scmp.eq.s32.totalorder %s29, 1
      %p112 = por %p110, %p111
      %p113 = scmp.ne.s32.totalorder %s104, %s105
      %p114 = scmp.eq.s32.totalorder %s29, 0
      %p115 = por %p113, %p114
      %p116 = scmp.ne.s32.totalorder %s104, %s105
      %p117 = scmp.eq.s32.totalorder %s30, 1
      %p118 = por %p116, %p117
      %p120 = scmp.ne.s32.totalorder %s105, %s119
      %p121 = scmp.eq.s32.totalorder %s30, 0
      %p122 = por %p120, %p121
      %s124 = sadd.s32 %s123, 1
      %p127 = scmp.eq.s32.totalorder %s24, 1
      %p128 = scmp.ne.s32.totalorder %s123, %s125
      %p129 = scmp.eq.s32.totalorder %s24, 0
      %p130 = por %p128, %p129
      %p131 = scmp.ne.s32.totalorder %s123, %s125
      %p132 = scmp.eq.s32.totalorder %s29, 1
      %p133 = por %p131, %p132
      %p134 = scmp.ne.s32.totalorder %s125, %s126
      %p135 = scmp.eq.s32.totalorder %s29, 0
      %p136 = por %p134, %p135
      %p137 = scmp.ne.s32.totalorder %s125, %s126
      %p138 = scmp.eq.s32.totalorder %s30, 1
      %p139 = por %p137, %p138
      %p141 = scmp.ne.s32.totalorder %s126, %s140
      %p142 = scmp.eq.s32.totalorder %s30, 0
      %p143 = por %p141, %p142
      %s145 = sadd.s32 %s144, 1
      %p148 = scmp.eq.s32.totalorder %s24, 1
      %p149 = scmp.ne.s32.totalorder %s144, %s146
      %p150 = scmp.eq.s32.totalorder %s24, 0
      %p151 = por %p149, %p150
      %p152 = scmp.ne.s32.totalorder %s144, %s146
      %p153 = scmp.eq.s32.totalorder %s29, 1
      %p154 = por %p152, %p153
      %p155 = scmp.ne.s32.totalorder %s146, %s147
      %p156 = scmp.eq.s32.totalorder %s29, 0
      %p157 = por %p155, %p156
      %p158 = scmp.ne.s32.totalorder %s146, %s147
      %p159 = scmp.eq.s32.totalorder %s30, 1
      %p160 = por %p158, %p159
      %p162 = scmp.ne.s32.totalorder %s147, %s161
      %p163 = scmp.eq.s32.totalorder %s30, 0
      %p164 = por %p162, %p163
      %s166 = sadd.s32 %s165, 1
      %p169 = scmp.eq.s32.totalorder %s24, 1
      %p170 = scmp.ne.s32.totalorder %s165, %s167
      %p171 = scmp.eq.s32.totalorder %s24, 0
      %p172 = por %p170, %p171
      %p173 = scmp.ne.s32.totalorder %s165, %s167
      %p174 = scmp.eq.s32.totalorder %s29, 1
      %p175 = por %p173, %p174
      %p176 = scmp.ne.s32.totalorder %s167, %s168
      %p177 = scmp.eq.s32.totalorder %s29, 0
      %p178 = por %p176, %p177
      %p179 = scmp.ne.s32.totalorder %s167, %s168
      %p180 = scmp.eq.s32.totalorder %s30, 1
      %p181 = por %p179, %p180
      %p183 = scmp.ne.s32.totalorder %s168, %s182
      %p184 = scmp.eq.s32.totalorder %s30, 0
      %p185 = por %p183, %p184
      %s187 = sadd.s32 %s186, 1
      %p190 = scmp.eq.s32.totalorder %s24, 1
      %p191 = scmp.ne.s32.totalorder %s186, %s188
      %p192 = scmp.eq.s32.totalorder %s24, 0
      %p193 = por %p191, %p192
      %p194 = scmp.ne.s32.totalorder %s186, %s188
      %p195 = scmp.eq.s32.totalorder %s29, 1
      %p196 = por %p194, %p195
      %p197 = scmp.ne.s32.totalorder %s188, %s189
      %p198 = scmp.eq.s32.totalorder %s29, 0
      %p199 = por %p197, %p198
      %p200 = scmp.ne.s32.totalorder %s188, %s189
      %p201 = scmp.eq.s32.totalorder %s30, 1
      %p202 = por %p200, %p201
      %p204 = scmp.ne.s32.totalorder %s189, %s203
      %p205 = scmp.eq.s32.totalorder %s30, 0
      %p206 = por %p204, %p205
      %s208 = sadd.s32 %s207, 1
      %p211 = scmp.eq.s32.totalorder %s24, 1
      %p212 = scmp.ne.s32.totalorder %s207, %s209
      %p213 = scmp.eq.s32.totalorder %s24, 0
      %p214 = por %p212, %p213
      %p215 = scmp.ne.s32.totalorder %s207, %s209
      %p216 = scmp.eq.s32.totalorder %s29, 1
      %p217 = por %p215, %p216
      %p218 = scmp.ne.s32.totalorder %s209, %s210
      %p219 = scmp.eq.s32.totalorder %s29, 0
      %p220 = por %p218, %p219
      %p221 = scmp.ne.s32.totalorder %s209, %s210
      %p222 = scmp.eq.s32.totalorder %s30, 1
      %p223 = por %p221, %p222
      %p225 = scmp.ne.s32.totalorder %s210, %s224
      %p226 = scmp.eq.s32.totalorder %s30, 0
      %p227 = por %p225, %p226
      %s228 = ssub.s32 %s31, %s43
      %s229 = ssub.s32 %s32, %s39
      %s230 = sor.u32 %s228, %s229
      %p231 = scmp.eq.s32.totalorder %s230, 0
      %s233 = sadd.s32 %s232, 1
      %s234 = scalar_select %p231, %s232, %s233
      %p237 = pneg %p231
      %p238 = scmp.eq.s32.totalorder %s24, 1
      %p239 = por %p237, %p238
      %p240 = scmp.ne.s32.totalorder %s232, %s235
      %p241 = scmp.eq.s32.totalorder %s24, 0
      %p242 = por %p240, %p241
      %p243 = scmp.ne.s32.totalorder %s232, %s235
      %p244 = scmp.eq.s32.totalorder %s29, 1
      %p245 = por %p243, %p244
      %p246 = scmp.ne.s32.totalorder %s235, %s236
      %p247 = scmp.eq.s32.totalorder %s29, 0
      %p248 = por %p246, %p247
      %p249 = scmp.ne.s32.totalorder %s235, %s236
      %p250 = scmp.eq.s32.totalorder %s30, 1
      %p251 = por %p249, %p250
      %p253 = scmp.ne.s32.totalorder %s236, %s252
      %p254 = scmp.eq.s32.totalorder %s30, 0
      %p255 = por %p253, %p254
      %p256 = scmp.le.s32.totalorder 1, %s24
      %p257 = scmp.lt.s32.totalorder %s24, 3
      %p258 = pnand %p256, %p257
      %p259 = pneg %p258
      // Predicated region
      $region9: #{tpu_custom_call.1} parent=5 // pred_check
        _
      $region10: #{tpu_custom_call.1} parent=5 // pred_check_branch
        %261 = sbr.rel (%p258) target = $region12
      $region11: #{tpu_custom_call.1} parent=5 // pred_region
        %s262 = ssub.s32 %s24, 1
        // Predicated region
        $region13: #{tpu_custom_call.1} parent=11 // pred_check
          %p263 = pneg %p115
        $region14: #{tpu_custom_call.1} parent=11 // pred_check_branch
          %265 = sbr.rel (%p263) target = $region16
        $region15: #{tpu_custom_call.1} parent=11 // pred_region
          %s267 = ssub.s32 3072, 3072
          %268 = vsyncadd [#allocation6], %s267
          %s269 = sshll.u32 [#allocation7], 4
          %s270 = int_to_ptr.vmem [resolvable:$true] %s269
          %275 = dma.hbm_to_vmem [thread:$0]  %s2, 3072, %s270, [#allocation6], 64, 64, 4
        $region16: #{tpu_custom_call.1} parent=11 // pred_fallthru
          _
        // Predicated region
        $region17: #{tpu_custom_call.1} parent=11 // pred_check
          %p276 = pneg %p136
        $region18: #{tpu_custom_call.1} parent=11 // pred_check_branch
          %278 = sbr.rel (%p276) target = $region20
        $region19: #{tpu_custom_call.1} parent=11 // pred_region
          _
        $region20: #{tpu_custom_call.1} parent=11 // pred_fallthru
          _
        // Predicated region
        $region21: #{tpu_custom_call.1} parent=11 // pred_check
          %p279 = pneg %p157
        $region22: #{tpu_custom_call.1} parent=11 // pred_check_branch
          %281 = sbr.rel (%p279) target = $region24
        $region23: #{tpu_custom_call.1} parent=11 // pred_region
          %s283 = ssub.s32 3072, 3072
          %284 = vsyncadd [#allocation9], %s283
          %s285 = sshll.u32 [#allocation8], 4
          %s286 = int_to_ptr.vmem [resolvable:$true] %s285
          %291 = dma.hbm_to_vmem [thread:$0]  %s4, 3072, %s286, [#allocation9], 64, 64, 4
        $region24: #{tpu_custom_call.1} parent=11 // pred_fallthru
          _
        // Predicated region
        $region25: #{tpu_custom_call.1} parent=11 // pred_check
          %p292 = pneg %p178
        $region26: #{tpu_custom_call.1} parent=11 // pred_check_branch
          %294 = sbr.rel (%p292) target = $region28
        $region27: #{tpu_custom_call.1} parent=11 // pred_region
          _
        $region28: #{tpu_custom_call.1} parent=11 // pred_fallthru
          _
        // Predicated region
        $region29: #{tpu_custom_call.1} parent=11 // pred_check
          %p295 = pneg %p199
        $region30: #{tpu_custom_call.1} parent=11 // pred_check_branch
          %297 = sbr.rel (%p295) target = $region32
        $region31: #{tpu_custom_call.1} parent=11 // pred_region
          %s299 = ssub.s32 1024, 1024
          %300 = vsyncadd [#allocation9], %s299
          %s301 = sshll.u32 [#allocation10], 4
          %s302 = int_to_ptr.vmem [resolvable:$true] %s301
          %307 = dma.hbm_to_vmem [thread:$0]  %s6, 1024, %s302, [#allocation9], 64, 64, 4
        $region32: #{tpu_custom_call.1} parent=11 // pred_fallthru
          _
        // Predicated region
        $region33: #{tpu_custom_call.1} parent=11 // pred_check
          %p308 = pneg %p220
        $region34: #{tpu_custom_call.1} parent=11 // pred_check_branch
          %310 = sbr.rel (%p308) target = $region36
        $region35: #{tpu_custom_call.1} parent=11 // pred_region
          _
        $region36: #{tpu_custom_call.1} parent=11 // pred_fallthru
          _
      $region12: #{tpu_custom_call.1} parent=5 // pred_fallthru
        _
      %p311 = scmp.lt.s32.totalorder %s24, 2
      // Predicated region
      $region37: #{tpu_custom_call.1} parent=5 // pred_check
        %p312 = pneg %p311
      $region38: #{tpu_custom_call.1} parent=5 // pred_check_branch
        %314 = sbr.rel (%p312) target = $region40
      $region39: #{tpu_custom_call.1} parent=5 // pred_region
        // Predicated region
        $region41: #{tpu_custom_call.1} parent=39 // pred_check
          %p315 = pneg %p58
        $region42: #{tpu_custom_call.1} parent=39 // pred_check_branch
          %317 = sbr.rel (%p315) target = $region44
        $region43: #{tpu_custom_call.1} parent=39 // pred_region
          %s318 = sand.u32 %s48, 1
          %s319 = scalar_lea.sflag [#allocation3], %s318
          %s320 = sand.u32 %s48, 1
          %s321 = smul.addr %s320, 8
          %s322 = scalar_lea.vmem [#allocation2], %s321
          %s323 = smul.u32 2, %s32
          %s325 = ssub.s32 128, 128
          %326 = vsyncadd %s319, %s325
          %s327 = smul.addr %s31, 4
          %s328 = sadd.s32 %s323, %s327
          %s329 = smul.addr %s328, 64
          %s330 = scalar_lea.hbm %s0, %s329
          %s331 = sshll.u32 %s322, 4
          %s332 = int_to_ptr.vmem [resolvable:$true] %s331
          %337 = dma.hbm_to_vmem [thread:$0]  %s330, 128, %s332, %s319, 64, 64, 4
        $region44: #{tpu_custom_call.1} parent=39 // pred_fallthru
          _
        // Predicated region
        $region45: #{tpu_custom_call.1} parent=39 // pred_check
          %p338 = pneg %p88
        $region46: #{tpu_custom_call.1} parent=39 // pred_check_branch
          %340 = sbr.rel (%p338) target = $region48
        $region47: #{tpu_custom_call.1} parent=39 // pred_region
          %s341 = sand.u32 %s24, 1
          %s342 = scalar_lea.sflag [#allocation6], %s341
          %s343 = sand.u32 %s78, 1
          %s344 = smul.addr %s343, 8
          %s345 = scalar_lea.vmem [#allocation5], %s344
          %s346 = sadd.s32 %s32, 1
          %s347 = smul.u32 2, %s346
          %s349 = ssub.s32 128, 128
          %350 = vsyncadd %s342, %s349
          %s351 = smul.addr %s31, 4
          %s352 = sadd.s32 %s347, %s351
          %s353 = smul.addr %s352, 64
          %s354 = scalar_lea.hbm %s1, %s353
          %s355 = sshll.u32 %s345, 4
          %s356 = int_to_ptr.vmem [resolvable:$true] %s355
          %361 = dma.hbm_to_vmem [thread:$0]  %s354, 128, %s356, %s342, 64, 64, 4
        $region48: #{tpu_custom_call.1} parent=39 // pred_fallthru
          _
      $region40: #{tpu_custom_call.1} parent=5 // pred_fallthru
        _
      %p362 = scmp.le.s32.totalorder 1, %s24
      %p363 = scmp.lt.s32.totalorder %s24, 3
      %p364 = pnand %p362, %p363
      %p365 = pneg %p364
      // Predicated region
      $region49: #{tpu_custom_call.1} parent=5 // pred_check
        _
      $region50: #{tpu_custom_call.1} parent=5 // pred_check_branch
        %367 = sbr.rel (%p364) target = $region52
      $region51: #{tpu_custom_call.1} parent=5 // pred_region
        %s368 = ssub.s32 %s24, 1
        %s369 = sand.u32 %s51, 1
        %s370 = scalar_lea.sflag [#allocation3], %s369
        %s371 = sand.u32 %s51, 1
        %s372 = smul.addr %s371, 8
        %s373 = scalar_lea.vmem [#allocation2], %s372
        // Predicated region
        $region53: #{tpu_custom_call.1} parent=51 // pred_check
          %p374 = pneg %p64
        $region54: #{tpu_custom_call.1} parent=51 // pred_check_branch
          %376 = sbr.rel (%p374) target = $region56
        $region55: #{tpu_custom_call.1} parent=51 // pred_region
          %377 = dma.done %s370, 128
        $region56: #{tpu_custom_call.1} parent=51 // pred_fallthru
          _
        %s378 = sand.u32 %s29, 1
        %s379 = scalar_lea.sflag [#allocation6], %s378
        %s380 = sand.u32 %s81, 1
        %s381 = smul.addr %s380, 8
        %s382 = scalar_lea.vmem [#allocation5], %s381
        // Predicated region
        $region57: #{tpu_custom_call.1} parent=51 // pred_check
          %p383 = pneg %p94
        $region58: #{tpu_custom_call.1} parent=51 // pred_check_branch
          %385 = sbr.rel (%p383) target = $region60
        $region59: #{tpu_custom_call.1} parent=51 // pred_region
          %386 = dma.done %s379, 128
        $region60: #{tpu_custom_call.1} parent=51 // pred_fallthru
          _
        // Predicated region
        $region61: #{tpu_custom_call.1} parent=51 // pred_check
          %p387 = pneg %p115
        $region62: #{tpu_custom_call.1} parent=51 // pred_check_branch
          %389 = sbr.rel (%p387) target = $region64
        $region63: #{tpu_custom_call.1} parent=51 // pred_region
          %390 = dma.done [#allocation6], 3072
        $region64: #{tpu_custom_call.1} parent=51 // pred_fallthru
          _
        // Predicated region
        $region65: #{tpu_custom_call.1} parent=51 // pred_check
          %p391 = pneg %p157
        $region66: #{tpu_custom_call.1} parent=51 // pred_check_branch
          %393 = sbr.rel (%p391) target = $region68
        $region67: #{tpu_custom_call.1} parent=51 // pred_region
          %394 = dma.done [#allocation9], 3072
        $region68: #{tpu_custom_call.1} parent=51 // pred_fallthru
          _
        // Predicated region
        $region69: #{tpu_custom_call.1} parent=51 // pred_check
          %p395 = pneg %p199
        $region70: #{tpu_custom_call.1} parent=51 // pred_check_branch
          %397 = sbr.rel (%p395) target = $region72
        $region71: #{tpu_custom_call.1} parent=51 // pred_region
          %398 = dma.done [#allocation9], 1024
        $region72: #{tpu_custom_call.1} parent=51 // pred_fallthru
          _
        %s399 = sand.u32 %s51, 1
        %s400 = scalar_lea.sflag [#allocation3], %s399
        %s401 = sand.u32 %s51, 1
        %s402 = smul.addr %s401, 8
        %s403 = scalar_lea.vmem [#allocation2], %s402
        %p404 = pneg %p64
        %p405 = pneg %p61
        %s406 = sand.u32 %s29, 1
        %s407 = scalar_lea.sflag [#allocation6], %s406
        %s408 = sand.u32 %s81, 1
        %s409 = smul.addr %s408, 8
        %s410 = scalar_lea.vmem [#allocation5], %s409
        %p411 = pneg %p94
        %p412 = pneg %p91
        %p413 = pneg %p115
        %p414 = pneg %p112
        %p415 = pneg %p136
        %p416 = pneg %p133
        %p417 = pneg %p157
        %p418 = pneg %p154
        %p419 = pneg %p178
        %p420 = pneg %p175
        %p421 = pneg %p199
        %p422 = pneg %p196
        %p423 = pneg %p220
        %p424 = pneg %p217
        %p425 = pneg %p248
        %p426 = pneg %p245
        %s427 = sand.u32 %s235, 1
        %s428 = scalar_lea.sflag [#allocation4], %s427
        %s429 = sand.u32 %s235, 1
        %s430 = smul.addr %s429, 16
        %s431 = scalar_lea.vmem [#allocation11], %s430
        %s432 = smul.u32 2, %s34
        %s433 = sadd.s32 %s34, 1
        %s434 = smul.u32 2, %s433
        %s435 = smul.u32 2, %s34
        %v437 = vld [vmem:[%s382] sm:$0xf]
        %v438 = vld [vmem:[%s382 + $0x4] sm:$0xf]
        %v439 = vld [vmem:[%s373 + $0x4] sm:$0xf]
        %v442 = vunpack.c.l.b16 %v437
        %v443 = vunpack.c.l.b16 %v438
        %v444 = vpack.c.b16 %v442, %v442
        %v445 = vpack.c.b16 %v443, %v443
        %vm447 = vcmask 1043456
        %v450 = vsel %vm447, %v439, %v444
        %vm453 = vcmask 1046528
        %v454 = vrot.slane %v450, 1
        %v455 = vrot.slane %v445, 1
        %v456 = vsel %vm453, %v454, %v455
        %vm459 = vcmask 1045504
        %v460 = vrot.slane %v450, 2
        %v461 = vrot.slane %v445, 2
        %v462 = vsel %vm459, %v460, %v461
        %v465 = vld [vmem:[#allocation7] sm:$0xf]
        %v466 = vld [vmem:[#allocation7 + $0x4] sm:$0xf]
        %v467 = vld [vmem:[#allocation7 + $0x8] sm:$0xf]
        %v468 = vld [vmem:[#allocation7 + $0xc] sm:$0xf]
        %v469 = vld [vmem:[#allocation7 + $0x10] sm:$0xf]
        %v470 = vld [vmem:[#allocation7 + $0x14] sm:$0xf]
        %v471 = vld [vmem:[#allocation7 + $0x18] sm:$0xf]
        %v472 = vld [vmem:[#allocation7 + $0x1c] sm:$0xf]
        %v473 = vld [vmem:[#allocation7 + $0x20] sm:$0xf]
        %v474 = vld [vmem:[#allocation7 + $0x24] sm:$0xf]
        %v475 = vld [vmem:[#allocation7 + $0x28] sm:$0xf]
        %v476 = vld [vmem:[#allocation7 + $0x2c] sm:$0xf]
        %v477 = vld [vmem:[#allocation7 + $0x30] sm:$0xf]
        %v478 = vld [vmem:[#allocation7 + $0x34] sm:$0xf]
        %v479 = vld [vmem:[#allocation7 + $0x38] sm:$0xf]
        %v480 = vld [vmem:[#allocation7 + $0x3c] sm:$0xf]
        %v481 = vld [vmem:[#allocation7 + $0x40] sm:$0xf]
        %v482 = vld [vmem:[#allocation7 + $0x44] sm:$0xf]
        %v483 = vld [vmem:[#allocation7 + $0x48] sm:$0xf]
        %v484 = vld [vmem:[#allocation7 + $0x4c] sm:$0xf]
        %v485 = vld [vmem:[#allocation7 + $0x50] sm:$0xf]
        %v486 = vld [vmem:[#allocation7 + $0x54] sm:$0xf]
        %v487 = vld [vmem:[#allocation7 + $0x58] sm:$0xf]
        %v488 = vld [vmem:[#allocation7 + $0x5c] sm:$0xf]
        %v489 = vld [vmem:[#allocation7 + $0x60] sm:$0xf]
        %v490 = vld [vmem:[#allocation7 + $0x64] sm:$0xf]
        %v491 = vld [vmem:[#allocation7 + $0x68] sm:$0xf]
        %v492 = vld [vmem:[#allocation7 + $0x6c] sm:$0xf]
        %v493 = vld [vmem:[#allocation7 + $0x70] sm:$0xf]
        %v494 = vld [vmem:[#allocation7 + $0x74] sm:$0xf]
        %v495 = vld [vmem:[#allocation7 + $0x78] sm:$0xf]
        %v496 = vld [vmem:[#allocation7 + $0x7c] sm:$0xf]
        %v497 = vld [vmem:[#allocation7 + $0x80] sm:$0xf]
        %v498 = vld [vmem:[#allocation7 + $0x84] sm:$0xf]
        %v499 = vld [vmem:[#allocation7 + $0x88] sm:$0xf]
        %v500 = vld [vmem:[#allocation7 + $0x8c] sm:$0xf]
        %v501 = vld [vmem:[#allocation7 + $0x90] sm:$0xf]
        %v502 = vld [vmem:[#allocation7 + $0x94] sm:$0xf]
        %v503 = vld [vmem:[#allocation7 + $0x98] sm:$0xf]
        %v504 = vld [vmem:[#allocation7 + $0x9c] sm:$0xf]
        %v505 = vld [vmem:[#allocation7 + $0xa0] sm:$0xf]
        %v506 = vld [vmem:[#allocation7 + $0xa4] sm:$0xf]
        %v507 = vld [vmem:[#allocation7 + $0xa8] sm:$0xf]
        %v508 = vld [vmem:[#allocation7 + $0xac] sm:$0xf]
        %v509 = vld [vmem:[#allocation7 + $0xb0] sm:$0xf]
        %v510 = vld [vmem:[#allocation7 + $0xb4] sm:$0xf]
        %v511 = vld [vmem:[#allocation7 + $0xb8] sm:$0xf]
        %v512 = vld [vmem:[#allocation7 + $0xbc] sm:$0xf]
        %v513 = vld [vmem:[%s3] sm:$0x1]
        %v515 = vlaneseq
        %v516 = vshrl.u32 %v515, 7
        %v517 = vsub.s32 0, %v516
        %v518 = vrot.slane %v513, %v517
        %v568 = vunpack.c.l.b16 %v465
        %v569 = vunpack.c.l.b16 %v466
        %v570 = vunpack.c.l.b16 %v467
        %v571 = vunpack.c.l.b16 %v468
        %v572 = vunpack.c.l.b16 %v469
        %v573 = vunpack.c.l.b16 %v470
        %v574 = vunpack.c.l.b16 %v471
        %v575 = vunpack.c.l.b16 %v472
        %v576 = vunpack.c.l.b16 %v473
        %v577 = vunpack.c.l.b16 %v474
        %v578 = vunpack.c.l.b16 %v475
        %v579 = vunpack.c.l.b16 %v476
        %v580 = vunpack.c.l.b16 %v477
        %v581 = vunpack.c.l.b16 %v478
        %v582 = vunpack.c.l.b16 %v479
        %v583 = vunpack.c.l.b16 %v480
        %v584 = vunpack.c.l.b16 %v481
        %v585 = vunpack.c.l.b16 %v482
        %v586 = vunpack.c.l.b16 %v483
        %v587 = vunpack.c.l.b16 %v484
        %v588 = vunpack.c.l.b16 %v485
        %v589 = vunpack.c.l.b16 %v486
        %v590 = vunpack.c.l.b16 %v487
        %v591 = vunpack.c.l.b16 %v488
        %v592 = vunpack.c.l.b16 %v489
        %v593 = vunpack.c.l.b16 %v490
        %v594 = vunpack.c.l.b16 %v491
        %v595 = vunpack.c.l.b16 %v492
        %v596 = vunpack.c.l.b16 %v493
        %v597 = vunpack.c.l.b16 %v494
        %v598 = vunpack.c.l.b16 %v495
        %v599 = vunpack.c.l.b16 %v496
        %v600 = vunpack.c.l.b16 %v497
        %v601 = vunpack.c.l.b16 %v498
        %v602 = vunpack.c.l.b16 %v499
        %v603 = vunpack.c.l.b16 %v500
        %v604 = vunpack.c.l.b16 %v501
        %v605 = vunpack.c.l.b16 %v502
        %v606 = vunpack.c.l.b16 %v503
        %v607 = vunpack.c.l.b16 %v504
        %v608 = vunpack.c.l.b16 %v505
        %v609 = vunpack.c.l.b16 %v506
        %v610 = vunpack.c.l.b16 %v507
        %v611 = vunpack.c.l.b16 %v508
        %v612 = vunpack.c.l.b16 %v509
        %v613 = vunpack.c.l.b16 %v510
        %v614 = vunpack.c.l.b16 %v511
        %v615 = vunpack.c.l.b16 %v512
        %v616 = vpack.c.b16 %v569, %v568
        %v617 = vpack.c.b16 %v571, %v570
        %v618 = vpack.c.b16 %v573, %v572
        %v619 = vpack.c.b16 %v575, %v574
        %v620 = vpack.c.b16 %v577, %v576
        %v621 = vpack.c.b16 %v579, %v578
        %v622 = vpack.c.b16 %v581, %v580
        %v623 = vpack.c.b16 %v583, %v582
        %v624 = vpack.c.b16 %v585, %v584
        %v625 = vpack.c.b16 %v587, %v586
        %v626 = vpack.c.b16 %v589, %v588
        %v627 = vpack.c.b16 %v591, %v590
        %v628 = vpack.c.b16 %v593, %v592
        %v629 = vpack.c.b16 %v595, %v594
        %v630 = vpack.c.b16 %v597, %v596
        %v631 = vpack.c.b16 %v599, %v598
        %v632 = vpack.c.b16 %v601, %v600
        %v633 = vpack.c.b16 %v603, %v602
        %v634 = vpack.c.b16 %v605, %v604
        %v635 = vpack.c.b16 %v607, %v606
        %v636 = vpack.c.b16 %v609, %v608
        %v637 = vpack.c.b16 %v611, %v610
        %v638 = vpack.c.b16 %v613, %v612
        %v639 = vpack.c.b16 %v615, %v614
        %664 = vmatprep.subr.bf16.mxu0 0
        %665 = vmatpush1.bf16.msra.mxu0 %v616
        %666 = vmatprep.subr.bf16.mxu0 0
        %667 = vmatpush1.bf16.msra.mxu0 %v617
        %668 = vmatprep.subr.bf16.mxu0 0
        %669 = vmatpush1.bf16.msra.mxu0 %v618
        %670 = vmatprep.subr.bf16.mxu0 0
        %671 = vmatpush1.bf16.msra.mxu0 %v619
        %672 = vmatprep.subr.bf16.mxu0 0
        %673 = vmatpush1.bf16.msra.mxu0 %v620
        %674 = vmatprep.subr.bf16.mxu0 0
        %675 = vmatpush1.bf16.msra.mxu0 %v621
        %676 = vmatprep.subr.bf16.mxu0 0
        %677 = vmatpush1.bf16.msra.mxu0 %v622
        %678 = vmatprep.subr.bf16.mxu0 0
        %679 = vmatpush1.bf16.msra.mxu0 %v623
        %680 = vmatprep.subr.bf16.mxu0 0
        %681 = vmatpush1.bf16.msra.mxu0 %v624
        %682 = vmatprep.subr.bf16.mxu0 0
        %683 = vmatpush1.bf16.msra.mxu0 %v625
        %684 = vmatprep.subr.bf16.mxu0 0
        %685 = vmatpush1.bf16.msra.mxu0 %v626
        %686 = vmatprep.subr.bf16.mxu0 0
        %687 = vmatpush1.bf16.msra.mxu0 %v627
        %688 = vmatprep.subr.bf16.mxu0 0
        %689 = vmatpush1.bf16.msra.mxu0 %v628
        %690 = vmatprep.subr.bf16.mxu0 0
        %691 = vmatpush1.bf16.msra.mxu0 %v629
        %692 = vmatprep.subr.bf16.mxu0 0
        %693 = vmatpush1.bf16.msra.mxu0 %v630
        %694 = vmatprep.subr.bf16.mxu0 0
        %695 = vmatpush1.bf16.msra.mxu0 %v631
        %696 = vmatprep.mubr.bf16.mxu0 %v456
        %697 = vmatmul.mubr.bf16.gmra.mrb[0].mxu0 %v450
        %v698 = vpop.f32.mrb[0].mxu0
        %v699 = vadd.f32 %v518, %v698
        %v700 = vpop.f32.mrb[0].mxu0
        %v701 = vpop.f32.mrb[0].mxu0
        %v702 = vadd.f32 %v518, %v701
        %v703 = vpop.f32.mrb[0].mxu0
        %704 = vmatprep.mubr.bf16.mxu0 %v455
        %705 = vmatmul.mubr.bf16.gmra.mrb[0].mxu0 %v445
        %v706 = vpop.f32.mrb[0].mxu0
        %v707 = vadd.f32 %v518, %v706
        %v708 = vpop.f32.mrb[0].mxu0
        %v709 = vpop.f32.mrb[0].mxu0
        %v710 = vpop.f32.mrb[0].mxu0
        %711 = vdwg.mxu0
        %712 = vmatprep.subr.bf16.mxu0 0
        %713 = vmatpush1.bf16.msra.mxu0 %v632
        %714 = vmatprep.subr.bf16.mxu0 0
        %715 = vmatpush1.bf16.msra.mxu0 %v633
        %716 = vmatprep.subr.bf16.mxu0 0
        %717 = vmatpush1.bf16.msra.mxu0 %v634
        %718 = vmatprep.subr.bf16.mxu0 0
        %719 = vmatpush1.bf16.msra.mxu0 %v635
        %720 = vmatprep.subr.bf16.mxu0 0
        %721 = vmatpush1.bf16.msra.mxu0 %v636
        %722 = vmatprep.subr.bf16.mxu0 0
        %723 = vmatpush1.bf16.msra.mxu0 %v637
        %724 = vmatprep.subr.bf16.mxu0 0
        %725 = vmatpush1.bf16.msra.mxu0 %v638
        %726 = vmatprep.subr.bf16.mxu0 0
        %727 = vmatpush1.bf16.msra.mxu0 %v639
        %728 = vmatprep.subr.bf16.mxu0 0
        %729 = vmatpush1.bf16.msra.mxu0 0
        %730 = vmatprep.subr.bf16.mxu0 0
        %731 = vmatpush1.bf16.msra.mxu0 0
        %732 = vmatprep.subr.bf16.mxu0 0
        %733 = vmatpush1.bf16.msra.mxu0 0
        %734 = vmatprep.subr.bf16.mxu0 0
        %735 = vmatpush1.bf16.msra.mxu0 0
        %736 = vmatprep.subr.bf16.mxu0 0
        %737 = vmatpush1.bf16.msra.mxu0 0
        %738 = vmatprep.subr.bf16.mxu0 0
        %739 = vmatpush1.bf16.msra.mxu0 0
        %740 = vmatprep.subr.bf16.mxu0 0
        %741 = vmatpush1.bf16.msra.mxu0 0
        %742 = vmatprep.subr.bf16.mxu0 0
        %743 = vmatpush1.bf16.msra.mxu0 0
        %744 = vmatprep.mubr.bf16.mxu0 0
        %745 = vmatmul.mubr.bf16.gmra.mrb[0].mxu0 %v462
        %v746 = vpop.f32.mrb[0].mxu0
        %v747 = vadd.f32 %v699, %v746
        %v748 = vpop.f32.mrb[0].mxu0
        %v749 = vpop.f32.mrb[0].mxu0
        %v750 = vadd.f32 %v702, %v749
        %v751 = vpop.f32.mrb[0].mxu0
        %752 = vmatprep.mubr.bf16.mxu0 0
        %753 = vmatmul.mubr.bf16.gmra.mrb[0].mxu0 %v461
        %v754 = vpop.f32.mrb[0].mxu0
        %v755 = vadd.f32 %v707, %v754
        %v756 = vpop.f32.mrb[0].mxu0
        %v757 = vpop.f32.mrb[0].mxu0
        %v758 = vpop.f32.mrb[0].mxu0
        %759 = vdwg.mxu0
        %v760 = vmax.f32 %v747, 0.0
        %v761 = vmax.f32 %v750, 0.0
        %v762 = vmax.f32 %v755, 0.0
        %s763 = smul.u32 %s34, 16
        %s764 = ssub.s32 %s763, 4
        %v765 = vlaneseq
        %v766 = vshrl.u32 %v765, 7
        %v767 = vadd.s32 %v766, 8
        %v768 = vadd.s32 %v766, 16
        %v769 = vstv %s764
        %v770 = vadd.s32 %v769, %v766
        %v771 = vadd.s32 %v769, %v767
        %v772 = vadd.s32 %v769, %v768
        %vm773 = vcmp.ge.s32.totalorder %v770, 0
        %vm774 = vcmp.ge.s32.totalorder %v771, 0
        %vm775 = vcmp.ge.s32.totalorder %v772, 0
        %v776 = vsel %vm773, 1, 0
        %v777 = vsel %vm774, 1, 0
        %v778 = vsel %vm775, 1, 0
        %vm779 = vcmp.eq.s32.totalorder %v776, 1
        %vm780 = vcmp.eq.s32.totalorder %v777, 1
        %vm781 = vcmp.eq.s32.totalorder %v778, 1
        %v782 = vsel %vm779, %v760, 0.0
        %v783 = vsel %vm780, %v761, 0.0
        %v784 = vsel %vm781, %v762, 0.0
        %v785 = vpack.c.bf16 %v783, %v782
        %v786 = vpack.c.bf16 %v784, %v784
        %v789 = vrot.slane %v785, 1
        %v790 = vrot.slane %v786, 1
        %v791 = vsel %vm453, %v789, %v790
        %v793 = vrot.slane %v785, 2
        %v794 = vrot.slane %v786, 2
        %v795 = vsel %vm459, %v793, %v794
        %v797 = vld [vmem:[#allocation8] sm:$0xf]
        %v798 = vld [vmem:[#allocation8 + $0x4] sm:$0xf]
        %v799 = vld [vmem:[#allocation8 + $0x8] sm:$0xf]
        %v800 = vld [vmem:[#allocation8 + $0xc] sm:$0xf]
        %v801 = vld [vmem:[#allocation8 + $0x10] sm:$0xf]
        %v802 = vld [vmem:[#allocation8 + $0x14] sm:$0xf]
        %v803 = vld [vmem:[#allocation8 + $0x18] sm:$0xf]
        %v804 = vld [vmem:[#allocation8 + $0x1c] sm:$0xf]
        %v805 = vld [vmem:[#allocation8 + $0x20] sm:$0xf]
        %v806 = vld [vmem:[#allocation8 + $0x24] sm:$0xf]
        %v807 = vld [vmem:[#allocation8 + $0x28] sm:$0xf]
        %v808 = vld [vmem:[#allocation8 + $0x2c] sm:$0xf]
        %v809 = vld [vmem:[#allocation8 + $0x30] sm:$0xf]
        %v810 = vld [vmem:[#allocation8 + $0x34] sm:$0xf]
        %v811 = vld [vmem:[#allocation8 + $0x38] sm:$0xf]
        %v812 = vld [vmem:[#allocation8 + $0x3c] sm:$0xf]
        %v813 = vld [vmem:[#allocation8 + $0x40] sm:$0xf]
        %v814 = vld [vmem:[#allocation8 + $0x44] sm:$0xf]
        %v815 = vld [vmem:[#allocation8 + $0x48] sm:$0xf]
        %v816 = vld [vmem:[#allocation8 + $0x4c] sm:$0xf]
        %v817 = vld [vmem:[#allocation8 + $0x50] sm:$0xf]
        %v818 = vld [vmem:[#allocation8 + $0x54] sm:$0xf]
        %v819 = vld [vmem:[#allocation8 + $0x58] sm:$0xf]
        %v820 = vld [vmem:[#allocation8 + $0x5c] sm:$0xf]
        %v821 = vld [vmem:[#allocation8 + $0x60] sm:$0xf]
        %v822 = vld [vmem:[#allocation8 + $0x64] sm:$0xf]
        %v823 = vld [vmem:[#allocation8 + $0x68] sm:$0xf]
        %v824 = vld [vmem:[#allocation8 + $0x6c] sm:$0xf]
        %v825 = vld [vmem:[#allocation8 + $0x70] sm:$0xf]
        %v826 = vld [vmem:[#allocation8 + $0x74] sm:$0xf]
        %v827 = vld [vmem:[#allocation8 + $0x78] sm:$0xf]
        %v828 = vld [vmem:[#allocation8 + $0x7c] sm:$0xf]
        %v829 = vld [vmem:[#allocation8 + $0x80] sm:$0xf]
        %v830 = vld [vmem:[#allocation8 + $0x84] sm:$0xf]
        %v831 = vld [vmem:[#allocation8 + $0x88] sm:$0xf]
        %v832 = vld [vmem:[#allocation8 + $0x8c] sm:$0xf]
        %v833 = vld [vmem:[#allocation8 + $0x90] sm:$0xf]
        %v834 = vld [vmem:[#allocation8 + $0x94] sm:$0xf]
        %v835 = vld [vmem:[#allocation8 + $0x98] sm:$0xf]
        %v836 = vld [vmem:[#allocation8 + $0x9c] sm:$0xf]
        %v837 = vld [vmem:[#allocation8 + $0xa0] sm:$0xf]
        %v838 = vld [vmem:[#allocation8 + $0xa4] sm:$0xf]
        %v839 = vld [vmem:[#allocation8 + $0xa8] sm:$0xf]
        %v840 = vld [vmem:[#allocation8 + $0xac] sm:$0xf]
        %v841 = vld [vmem:[#allocation8 + $0xb0] sm:$0xf]
        %v842 = vld [vmem:[#allocation8 + $0xb4] sm:$0xf]
        %v843 = vld [vmem:[#allocation8 + $0xb8] sm:$0xf]
        %v844 = vld [vmem:[#allocation8 + $0xbc] sm:$0xf]
        %v845 = vld [vmem:[%s5] sm:$0x1]
        %v847 = vlaneseq
        %v848 = vshrl.u32 %v847, 7
        %v849 = vsub.s32 0, %v848
        %v850 = vrot.slane %v845, %v849
        %v900 = vunpack.c.l.b16 %v797
        %v901 = vunpack.c.l.b16 %v798
        %v902 = vunpack.c.l.b16 %v799
        %v903 = vunpack.c.l.b16 %v800
        %v904 = vunpack.c.l.b16 %v801
        %v905 = vunpack.c.l.b16 %v802
        %v906 = vunpack.c.l.b16 %v803
        %v907 = vunpack.c.l.b16 %v804
        %v908 = vunpack.c.l.b16 %v805
        %v909 = vunpack.c.l.b16 %v806
        %v910 = vunpack.c.l.b16 %v807
        %v911 = vunpack.c.l.b16 %v808
        %v912 = vunpack.c.l.b16 %v809
        %v913 = vunpack.c.l.b16 %v810
        %v914 = vunpack.c.l.b16 %v811
        %v915 = vunpack.c.l.b16 %v812
        %v916 = vunpack.c.l.b16 %v813
        %v917 = vunpack.c.l.b16 %v814
        %v918 = vunpack.c.l.b16 %v815
        %v919 = vunpack.c.l.b16 %v816
        %v920 = vunpack.c.l.b16 %v817
        %v921 = vunpack.c.l.b16 %v818
        %v922 = vunpack.c.l.b16 %v819
        %v923 = vunpack.c.l.b16 %v820
        %v924 = vunpack.c.l.b16 %v821
        %v925 = vunpack.c.l.b16 %v822
        %v926 = vunpack.c.l.b16 %v823
        %v927 = vunpack.c.l.b16 %v824
        %v928 = vunpack.c.l.b16 %v825
        %v929 = vunpack.c.l.b16 %v826
        %v930 = vunpack.c.l.b16 %v827
        %v931 = vunpack.c.l.b16 %v828
        %v932 = vunpack.c.l.b16 %v829
        %v933 = vunpack.c.l.b16 %v830
        %v934 = vunpack.c.l.b16 %v831
        %v935 = vunpack.c.l.b16 %v832
        %v936 = vunpack.c.l.b16 %v833
        %v937 = vunpack.c.l.b16 %v834
        %v938 = vunpack.c.l.b16 %v835
        %v939 = vunpack.c.l.b16 %v836
        %v940 = vunpack.c.l.b16 %v837
        %v941 = vunpack.c.l.b16 %v838
        %v942 = vunpack.c.l.b16 %v839
        %v943 = vunpack.c.l.b16 %v840
        %v944 = vunpack.c.l.b16 %v841
        %v945 = vunpack.c.l.b16 %v842
        %v946 = vunpack.c.l.b16 %v843
        %v947 = vunpack.c.l.b16 %v844
        %v948 = vpack.c.b16 %v901, %v900
        %v949 = vpack.c.b16 %v903, %v902
        %v950 = vpack.c.b16 %v905, %v904
        %v951 = vpack.c.b16 %v907, %v906
        %v952 = vpack.c.b16 %v909, %v908
        %v953 = vpack.c.b16 %v911, %v910
        %v954 = vpack.c.b16 %v913, %v912
        %v955 = vpack.c.b16 %v915, %v914
        %v956 = vpack.c.b16 %v917, %v916
        %v957 = vpack.c.b16 %v919, %v918
        %v958 = vpack.c.b16 %v921, %v920
        %v959 = vpack.c.b16 %v923, %v922
        %v960 = vpack.c.b16 %v925, %v924
        %v961 = vpack.c.b16 %v927, %v926
        %v962 = vpack.c.b16 %v929, %v928
        %v963 = vpack.c.b16 %v931, %v930
        %v964 = vpack.c.b16 %v933, %v932
        %v965 = vpack.c.b16 %v935, %v934
        %v966 = vpack.c.b16 %v937, %v936
        %v967 = vpack.c.b16 %v939, %v938
        %v968 = vpack.c.b16 %v941, %v940
        %v969 = vpack.c.b16 %v943, %v942
        %v970 = vpack.c.b16 %v945, %v944
        %v971 = vpack.c.b16 %v947, %v946
        %996 = vmatprep.subr.bf16.mxu0 0
        %997 = vmatpush1.bf16.msra.mxu0 %v948
        %998 = vmatprep.subr.bf16.mxu0 0
        %999 = vmatpush1.bf16.msra.mxu0 %v949
        %1000 = vmatprep.subr.bf16.mxu0 0
        %1001 = vmatpush1.bf16.msra.mxu0 %v950
        %1002 = vmatprep.subr.bf16.mxu0 0
        %1003 = vmatpush1.bf16.msra.mxu0 %v951
        %1004 = vmatprep.subr.bf16.mxu0 0
        %1005 = vmatpush1.bf16.msra.mxu0 %v952
        %1006 = vmatprep.subr.bf16.mxu0 0
        %1007 = vmatpush1.bf16.msra.mxu0 %v953
        %1008 = vmatprep.subr.bf16.mxu0 0
        %1009 = vmatpush1.bf16.msra.mxu0 %v954
        %1010 = vmatprep.subr.bf16.mxu0 0
        %1011 = vmatpush1.bf16.msra.mxu0 %v955
        %1012 = vmatprep.subr.bf16.mxu0 0
        %1013 = vmatpush1.bf16.msra.mxu0 %v956
        %1014 = vmatprep.subr.bf16.mxu0 0
        %1015 = vmatpush1.bf16.msra.mxu0 %v957
        %1016 = vmatprep.subr.bf16.mxu0 0
        %1017 = vmatpush1.bf16.msra.mxu0 %v958
        %1018 = vmatprep.subr.bf16.mxu0 0
        %1019 = vmatpush1.bf16.msra.mxu0 %v959
        %1020 = vmatprep.subr.bf16.mxu0 0
        %1021 = vmatpush1.bf16.msra.mxu0 %v960
        %1022 = vmatprep.subr.bf16.mxu0 0
        %1023 = vmatpush1.bf16.msra.mxu0 %v961
        %1024 = vmatprep.subr.bf16.mxu0 0
        %1025 = vmatpush1.bf16.msra.mxu0 %v962
        %1026 = vmatprep.subr.bf16.mxu0 0
        %1027 = vmatpush1.bf16.msra.mxu0 %v963
        %1028 = vmatprep.mubr.bf16.mxu0 %v791
        %1029 = vmatmul.mubr.bf16.gmra.mrb[0].mxu0 %v785
        %v1030 = vpop.f32.mrb[0].mxu0
        %v1031 = vadd.f32 %v850, %v1030
        %v1032 = vpop.f32.mrb[0].mxu0
        %v1033 = vpop.f32.mrb[0].mxu0
        %v1034 = vadd.f32 %v850, %v1033
        %v1035 = vpop.f32.mrb[0].mxu0
        %1036 = vdwg.mxu0
        %1037 = vmatprep.subr.bf16.mxu0 0
        %1038 = vmatpush1.bf16.msra.mxu0 %v964
        %1039 = vmatprep.subr.bf16.mxu0 0
        %1040 = vmatpush1.bf16.msra.mxu0 %v965
        %1041 = vmatprep.subr.bf16.mxu0 0
        %1042 = vmatpush1.bf16.msra.mxu0 %v966
        %1043 = vmatprep.subr.bf16.mxu0 0
        %1044 = vmatpush1.bf16.msra.mxu0 %v967
        %1045 = vmatprep.subr.bf16.mxu0 0
        %1046 = vmatpush1.bf16.msra.mxu0 %v968
        %1047 = vmatprep.subr.bf16.mxu0 0
        %1048 = vmatpush1.bf16.msra.mxu0 %v969
        %1049 = vmatprep.subr.bf16.mxu0 0
        %1050 = vmatpush1.bf16.msra.mxu0 %v970
        %1051 = vmatprep.subr.bf16.mxu0 0
        %1052 = vmatpush1.bf16.msra.mxu0 %v971
        %1053 = vmatprep.subr.bf16.mxu0 0
        %1054 = vmatpush1.bf16.msra.mxu0 0
        %1055 = vmatprep.subr.bf16.mxu0 0
        %1056 = vmatpush1.bf16.msra.mxu0 0
        %1057 = vmatprep.subr.bf16.mxu0 0
        %1058 = vmatpush1.bf16.msra.mxu0 0
        %1059 = vmatprep.subr.bf16.mxu0 0
        %1060 = vmatpush1.bf16.msra.mxu0 0
        %1061 = vmatprep.subr.bf16.mxu0 0
        %1062 = vmatpush1.bf16.msra.mxu0 0
        %1063 = vmatprep.subr.bf16.mxu0 0
        %1064 = vmatpush1.bf16.msra.mxu0 0
        %1065 = vmatprep.subr.bf16.mxu0 0
        %1066 = vmatpush1.bf16.msra.mxu0 0
        %1067 = vmatprep.subr.bf16.mxu0 0
        %1068 = vmatpush1.bf16.msra.mxu0 0
        %1069 = vmatprep.mubr.bf16.mxu0 0
        %1070 = vmatmul.mubr.bf16.gmra.mrb[0].mxu0 %v795
        %v1071 = vpop.f32.mrb[0].mxu0
        %v1072 = vadd.f32 %v1031, %v1071
        %v1073 = vpop.f32.mrb[0].mxu0
        %v1074 = vpop.f32.mrb[0].mxu0
        %v1075 = vadd.f32 %v1034, %v1074
        %v1076 = vpop.f32.mrb[0].mxu0
        %1077 = vdwg.mxu0
        %v1078 = vmax.f32 %v1072, 0.0
        %v1079 = vmax.f32 %v1075, 0.0
        %v1080 = vld [vmem:[#allocation10] sm:$0xf]
        %v1081 = vld [vmem:[#allocation10 + $0x4] sm:$0xf]
        %v1082 = vld [vmem:[#allocation10 + $0x8] sm:$0xf]
        %v1083 = vld [vmem:[#allocation10 + $0xc] sm:$0xf]
        %v1084 = vld [vmem:[#allocation10 + $0x10] sm:$0xf]
        %v1085 = vld [vmem:[#allocation10 + $0x14] sm:$0xf]
        %v1086 = vld [vmem:[#allocation10 + $0x18] sm:$0xf]
        %v1087 = vld [vmem:[#allocation10 + $0x1c] sm:$0xf]
        %v1088 = vld [vmem:[#allocation10 + $0x20] sm:$0xf]
        %v1089 = vld [vmem:[#allocation10 + $0x24] sm:$0xf]
        %v1090 = vld [vmem:[#allocation10 + $0x28] sm:$0xf]
        %v1091 = vld [vmem:[#allocation10 + $0x2c] sm:$0xf]
        %v1092 = vld [vmem:[#allocation10 + $0x30] sm:$0xf]
        %v1093 = vld [vmem:[#allocation10 + $0x34] sm:$0xf]
        %v1094 = vld [vmem:[#allocation10 + $0x38] sm:$0xf]
        %v1095 = vld [vmem:[#allocation10 + $0x3c] sm:$0xf]
        %v1096 = vld [vmem:[%s7] sm:$0x1]
        %v1098 = vlaneseq
        %v1099 = vshrl.u32 %v1098, 7
        %v1100 = vsub.s32 0, %v1099
        %v1101 = vrot.slane %v1096, %v1100
        %v1103 = vpack.c.b16 %v443, %v442
        %v1121 = vunpack.c.l.b16 %v1080
        %v1122 = vunpack.c.l.b16 %v1081
        %v1123 = vunpack.c.l.b16 %v1082
        %v1124 = vunpack.c.l.b16 %v1083
        %v1125 = vunpack.c.l.b16 %v1084
        %v1126 = vunpack.c.l.b16 %v1085
        %v1127 = vunpack.c.l.b16 %v1086
        %v1128 = vunpack.c.l.b16 %v1087
        %v1129 = vunpack.c.l.b16 %v1088
        %v1130 = vunpack.c.l.b16 %v1089
        %v1131 = vunpack.c.l.b16 %v1090
        %v1132 = vunpack.c.l.b16 %v1091
        %v1133 = vunpack.c.l.b16 %v1092
        %v1134 = vunpack.c.l.b16 %v1093
        %v1135 = vunpack.c.l.b16 %v1094
        %v1136 = vunpack.c.l.b16 %v1095
        %v1137 = vpack.c.b16 %v1122, %v1121
        %v1138 = vpack.c.b16 %v1124, %v1123
        %v1139 = vpack.c.b16 %v1126, %v1125
        %v1140 = vpack.c.b16 %v1128, %v1127
        %v1141 = vpack.c.b16 %v1130, %v1129
        %v1142 = vpack.c.b16 %v1132, %v1131
        %v1143 = vpack.c.b16 %v1134, %v1133
        %v1144 = vpack.c.b16 %v1136, %v1135
        %1153 = vmatprep.subr.bf16.mxu0 0
        %1154 = vmatpush1.bf16.msra.mxu0 %v1137
        %1155 = vmatprep.subr.bf16.mxu0 0
        %1156 = vmatpush1.bf16.msra.mxu0 %v1138
        %1157 = vmatprep.subr.bf16.mxu0 0
        %1158 = vmatpush1.bf16.msra.mxu0 %v1139
        %1159 = vmatprep.subr.bf16.mxu0 0
        %1160 = vmatpush1.bf16.msra.mxu0 %v1140
        %1161 = vmatprep.subr.bf16.mxu0 0
        %1162 = vmatpush1.bf16.msra.mxu0 %v1141
        %1163 = vmatprep.subr.bf16.mxu0 0
        %1164 = vmatpush1.bf16.msra.mxu0 %v1142
        %1165 = vmatprep.subr.bf16.mxu0 0
        %1166 = vmatpush1.bf16.msra.mxu0 %v1143
        %1167 = vmatprep.subr.bf16.mxu0 0
        %1168 = vmatpush1.bf16.msra.mxu0 %v1144
        %1169 = vmatprep.subr.bf16.mxu0 0
        %1170 = vmatpush1.bf16.msra.mxu0 0
        %1171 = vmatprep.subr.bf16.mxu0 0
        %1172 = vmatpush1.bf16.msra.mxu0 0
        %1173 = vmatprep.subr.bf16.mxu0 0
        %1174 = vmatpush1.bf16.msra.mxu0 0
        %1175 = vmatprep.subr.bf16.mxu0 0
        %1176 = vmatpush1.bf16.msra.mxu0 0
        %1177 = vmatprep.subr.bf16.mxu0 0
        %1178 = vmatpush1.bf16.msra.mxu0 0
        %1179 = vmatprep.subr.bf16.mxu0 0
        %1180 = vmatpush1.bf16.msra.mxu0 0
        %1181 = vmatprep.subr.bf16.mxu0 0
        %1182 = vmatpush1.bf16.msra.mxu0 0
        %1183 = vmatprep.subr.bf16.mxu0 0
        %1184 = vmatpush1.bf16.msra.mxu0 0
        %1185 = vmatprep.mubr.bf16.mxu0 0
        %1186 = vmatmul.mubr.bf16.gmra.mrb[0].mxu0 %v1103
        %v1187 = vpop.f32.mrb[0].mxu0
        %v1188 = vadd.f32 %v1101, %v1187
        %v1189 = vpop.f32.mrb[0].mxu0
        %v1190 = vpop.f32.mrb[0].mxu0
        %v1191 = vadd.f32 %v1101, %v1190
        %v1192 = vpop.f32.mrb[0].mxu0
        %1193 = vdwg.mxu0
        %v1194 = vadd.f32 %v1078, %v1188
        %v1195 = vadd.f32 %v1079, %v1191
        %v1196 = vmax.f32 %v1194, 0.0
        %v1197 = vmax.f32 %v1195, 0.0
        %1198 = vst [vmem:[%s431] sm:$0xff] %v1196
        %1199 = vst [vmem:[%s431 + $0x8] sm:$0xff] %v1197
        %s1200 = sand.u32 %s235, 1
        %s1201 = scalar_lea.sflag [#allocation4], %s1200
        %s1202 = sand.u32 %s235, 1
        %s1203 = smul.addr %s1202, 16
        %s1204 = scalar_lea.vmem [#allocation11], %s1203
        // Predicated region
        $region73: #{tpu_custom_call.1} parent=51 // pred_check
          %p1205 = pneg %p245
        $region74: #{tpu_custom_call.1} parent=51 // pred_check_branch
          %1207 = sbr.rel (%p1205) target = $region76
        $region75: #{tpu_custom_call.1} parent=51 // pred_region
          %s1208 = smul.u32 2, %s34
          %s1210 = ssub.s32 256, 256
          %1211 = vsyncadd %s1201, %s1210
          %s1212 = smul.addr %s33, 2
          %s1213 = sadd.s32 %s1208, %s1212
          %s1214 = smul.addr %s1213, 128
          %s1215 = scalar_lea.hbm %s8, %s1214
          %s1216 = sshll.u32 %s1204, 4
          %s1217 = int_to_ptr.vmem [resolvable:$true] %s1216
          %1222 = dma.vmem_to_hbm [thread:$0]  %s1217, 256, %s1215, %s1201, 128, 128, 8
        $region76: #{tpu_custom_call.1} parent=51 // pred_fallthru
          _
      $region52: #{tpu_custom_call.1} parent=5 // pred_fallthru
        _
      %p1223 = scmp.le.s32.totalorder 2, %s24
      // Predicated region
      $region77: #{tpu_custom_call.1} parent=5 // pred_check
        %p1224 = pneg %p1223
      $region78: #{tpu_custom_call.1} parent=5 // pred_check_branch
        %1226 = sbr.rel (%p1224) target = $region80
      $region79: #{tpu_custom_call.1} parent=5 // pred_region
        %s1227 = ssub.s32 %s24, 2
        // Predicated region
        $region81: #{tpu_custom_call.1} parent=79 // pred_check
          %p1228 = pneg %p251
        $region82: #{tpu_custom_call.1} parent=79 // pred_check_branch
          %1230 = sbr.rel (%p1228) target = $region84
        $region83: #{tpu_custom_call.1} parent=79 // pred_region
          %s1231 = sand.u32 %s236, 1
          %s1232 = scalar_lea.sflag [#allocation4], %s1231
          %s1233 = sand.u32 %s236, 1
          %s1234 = smul.addr %s1233, 16
          %s1235 = scalar_lea.vmem [#allocation11], %s1234
          %1236 = dma.done %s1232, 256
        $region84: #{tpu_custom_call.1} parent=79 // pred_fallthru
          _
      $region80: #{tpu_custom_call.1} parent=5 // pred_fallthru
        _
    $region6: #{tpu_custom_call.1} parent=1 // loop_footer
      %s28 = sadd.s32 1, %s24
    $region7: #{tpu_custom_call.1} parent=1 // loop_footer_branch
      %23 = sbr.rel target = $region3
    $region8: #{tpu_custom_call.1} parent=1 // loop_exit
      _
    %1237 = vsyncpa [#allocation3], 1
    %s1238 = scalar_lea.sflag [#allocation3], 1
    %1239 = vsyncpa %s1238, 1
    %1240 = vsyncpa [#allocation6], 1
    %s1241 = scalar_lea.sflag [#allocation6], 1
    %1242 = vsyncpa %s1241, 1
    %1243 = vsyncpa [#allocation9], 1
    %1244 = vsyncpa [#allocation4], 1
    %s1245 = scalar_lea.sflag [#allocation4], 1
    %1246 = vsyncpa %s1245, 1

</llo_original>
